<compile_context>
chip_gen: v7x
topology: tpu7x:2x2x1
jax: 0.10.0
libtpu: 0.0.40
codegen_flags: <defaults>
</compile_context>

<pallas_src>
import functools

import jax
import jax.numpy as jnp
from jax.experimental import pallas as pl
from jax.experimental.pallas import tpu as pltpu


def _round_up(v, m):
    return -(-v // m) * m


def _pinn_kernel(modes, inner, n_chunks, compute_dtype, x_ref, *refs):
    """Full PINN forward on one batch tile; batch lives on the 128-lane axis.

    refs = (w0, b0, w1, b1, ..., out_ref)
      mode "vpu_in"  : wi is (out_i, in_i), tiny in_i -> VPU broadcast-mul-adds
      mode "vpu_out1": wi is (in_i, 1)      -> VPU mul + XLU sublane-sum
      mode "mxu"     : wi is (out_i, in_i)  -> MXU matmul, f32 accumulation
      bi: (out_i, 1) float32
      x_ref: (d_in, tile_m)    out_ref: (d_out, tile_m)

    Semantics (use_layernorm=False):
        a   = tanh(W0 @ x + b0)
        a   = tanh(Wi @ a + bi)        for i = 1 .. L-2
        out = softplus(W_{L-1} @ a + b_{L-1})
    """
    out_ref = refs[-1]
    params = refs[:-1]
    n_linear = len(modes)

    def run_chunk(off):
        a = x_ref[:, pl.ds(off, inner)]
        if a.dtype != compute_dtype:
            a = a.astype(compute_dtype)
        for i, mode in enumerate(modes):
            w = params[2 * i][...]        # already compute_dtype (pre-cast in wrapper)
            b = params[2 * i + 1][...]    # (out_i, 1), f32
            if mode == "vpu_in":
                # Tiny contraction (e.g. (x, t) inputs, K=2): keep it off the MXU;
                # VPU broadcast-multiply-adds run in otherwise-idle slots.
                z = b
                for kk in range(w.shape[1]):
                    z = z + (w[:, kk:kk + 1] * a[kk:kk + 1, :]).astype(jnp.float32)
            elif mode == "vpu_out1":
                # d_out == 1: VPU multiply + XLU sublane-sum instead of an M=1
                # MXU push + result-FIFO drain.
                prod = (w * a).astype(jnp.float32)            # (K,1)*(K,inner)
                z = jnp.sum(prod, axis=0, keepdims=True) + b  # (1, inner)
            else:
                z = jnp.dot(w, a, preferred_element_type=jnp.float32) + b
            if i < n_linear - 1:
                a = jnp.tanh(z.astype(compute_dtype))         # hidden activation
            else:
                a = jnp.logaddexp(z, 0.0)                     # stable softplus, f32
        out_ref[:, pl.ds(off, inner)] = a.astype(out_ref.dtype)

    if n_chunks == 1:
        run_chunk(0)
    else:
        # Lane-chunk loop bounds vreg live ranges (real loop, not Python unroll).
        @pl.loop(0, n_chunks)
        def _(c):
            run_chunk(pl.multiple_of(c * inner, 128))


def pinn_forward(x, weights, biases, *, tile_m=2048, compute_dtype=jnp.float32,
                 feature_major=False):
    """PINN forward pass.

    x: (N, d_in) batch-major, or (d_in, N) if feature_major=True (skips the
       wrapper-level transpose — an extra HBM pass over x at large N).
    weights[i]: (layers[i+1], layers[i]) nn.Linear layout; biases[i]: (layers[i+1],)
    compute_dtype: jnp.float32 (default; keep on v5e) or jnp.bfloat16 for the
       hidden tanh path on v6e/v7x.  MXU accumulation and softplus stay f32.
    """
    d_in = weights[0].shape[1]
    d_out = weights[-1].shape[0]

    x_t = x if feature_major else x.T      # batch on lanes: (d_in, N)
    assert x_t.shape[0] == d_in
    N = x_t.shape[1]

    # Tile selection: large tiles amortize ~0.35us/grid-step overhead, but keep
    # >= 2 grid steps (when N allows) so "parallel" shards across v7x's two TCs.
    tile_m = max(128, (int(tile_m) // 128) * 128)
    if N <= 256:
        tile_m = N
    else:
        tile_m = min(tile_m, _round_up(pl.cdiv(N, 2), 128))
    # Inner lane-chunking keeps the live f32 activation slab at ~32 vregs.
    inner = 512 if tile_m % 512 == 0 else tile_m
    n_chunks = tile_m // inner
    grid = (pl.cdiv(N, tile_m),)

    # Per-layer execution mode + weight layout; pre-cast weights once here.
    modes, params_flat = [], []
    in_specs = [pl.BlockSpec((d_in, tile_m), lambda i: (0, i))]
    for li, (w, b) in enumerate(zip(weights, biases)):
        out_d, in_d = w.shape
        if li == 0 and in_d <= 8:
            mode, wk = "vpu_in", w
        elif out_d == 1:
            mode, wk = "vpu_out1", w.T                 # (in_d, 1)
        else:
            mode, wk = "mxu", w
        if compute_dtype != jnp.float32:
            wk = wk.astype(compute_dtype)              # cast once, not per grid step
        bk = b.reshape(out_d, 1).astype(jnp.float32)
        modes.append(mode)
        params_flat += [wk, bk]
        # Constant index_map -> weights/biases resident in VMEM across the grid.
        in_specs += [pl.BlockSpec(wk.shape, lambda i: (0, 0)),
                     pl.BlockSpec(bk.shape, lambda i: (0, 0))]

    out_spec = pl.BlockSpec((d_out, tile_m), lambda i: (0, i))

    # Advisory scheduling hint for XLA around the custom call.
    flops = 2 * N * sum(int(w.shape[0] * w.shape[1]) for w in weights)
    transcendentals = N * (sum(int(w.shape[0]) for w in weights[:-1]) + 2 * d_out)
    bytes_accessed = 4 * int(x_t.size + sum(int(w.size) for w in weights)
                             + sum(int(b.size) for b in biases) + N * d_out)

    out_t = pl.pallas_call(
        functools.partial(_pinn_kernel, tuple(modes), inner, n_chunks, compute_dtype),
        out_shape=jax.ShapeDtypeStruct((d_out, N), x.dtype),
        grid_spec=pl.GridSpec(grid=grid, in_specs=in_specs, out_specs=out_spec),
        compiler_params=pltpu.CompilerParams(
            dimension_semantics=("parallel",)),
        cost_estimate=pl.CostEstimate(
            flops=flops,
            transcendentals=transcendentals,
            bytes_accessed=bytes_accessed),
    )(x_t, *params_flat)
    return out_t.T   # (d_out, N) -> (N, d_out); for d_out=1 this is a reshape.


def init_pinn_params(key, layers):
    """Xavier-normal weights (gain=1.0), zero biases, as in the PyTorch __init__.

    Weights kept in nn.Linear layout: (out_features, in_features)."""
    weights, biases = [], []
    for i in range(len(layers) - 1):
        key, sub = jax.random.split(key)
        fan_in, fan_out = layers[i], layers[i + 1]
        std = (2.0 / (fan_in + fan_out)) ** 0.5
        w = std * jax.random.normal(sub, (fan_out, fan_in), dtype=jnp.float32)
        b = jnp.zeros((fan_out,), dtype=jnp.float32)
        weights.append(w)
        biases.append(b)
    return weights, biases


def pinn_reference(x, weights, biases):
    """Pure-JAX reference mirroring the PyTorch forward (use_layernorm=False)."""
    a = jnp.tanh(x @ weights[0].T + biases[0])
    for i in range(1, len(weights) - 1):
        a = jnp.tanh(a @ weights[i].T + biases[i])
    z = a @ weights[-1].T + biases[-1]
    return jnp.logaddexp(z, 0.0)


if __name__ == "__main__":
    layers = [2, 32, 32, 32, 1]     # typical PINN: (x, t) -> u
    batch = 2048                    # -> tile_m=1024, grid=2 (both v7x TCs), 2x512-lane chunks

    key = jax.random.PRNGKey(0)
    key, kx = jax.random.split(key)
    x = jax.random.normal(kx, (batch, layers[0]), dtype=jnp.float32)
    weights, biases = init_pinn_params(key, layers)

    ref = pinn_reference(x, weights, biases)

    # f32 path, batch-major input (wrapper transposes to lane-major).
    out = jax.block_until_ready(pinn_forward(x, weights, biases))
    assert out.shape == (batch, layers[-1])
    err = float(jnp.max(jnp.abs(out - ref)))
    assert err < 1e-4, f"f32 mismatch vs reference: max abs err = {err}"

    # f32 path, feature-major input (skips the wrapper x.T HBM pass).
    out_fm = jax.block_until_ready(
        pinn_forward(x.T, weights, biases, feature_major=True))
    err_fm = float(jnp.max(jnp.abs(out_fm - ref)))
    assert err_fm < 1e-4, f"feature-major mismatch vs reference: max abs err = {err_fm}"

    # bf16 hidden path (v6e/v7x EUP/MXU friendly); loose tolerance by design.
    out_bf = jax.block_until_ready(
        pinn_forward(x, weights, biases, compute_dtype=jnp.bfloat16))
    assert bool(jnp.all(jnp.isfinite(out_bf)))
    err_bf = float(jnp.max(jnp.abs(out_bf - ref)))
    assert err_bf < 0.2, f"bf16 path diverged from reference: max abs err = {err_bf}"

    print("KERNEL_OK")
</pallas_src>

<mosaic_0001>
module attributes {stable_mosaic.version = 11 : i64} {
  func.func @_pinn_kernel(%arg0: i32, %arg1: memref<2x1024xf32, #tpu.memory_space<vmem>>, %arg2: memref<32x2xf32, #tpu.memory_space<vmem>>, %arg3: memref<32x1xf32, #tpu.memory_space<vmem>>, %arg4: memref<32x32xf32, #tpu.memory_space<vmem>>, %arg5: memref<32x1xf32, #tpu.memory_space<vmem>>, %arg6: memref<32x32xf32, #tpu.memory_space<vmem>>, %arg7: memref<32x1xf32, #tpu.memory_space<vmem>>, %arg8: memref<32x1xf32, #tpu.memory_space<vmem>>, %arg9: memref<1x1xf32, #tpu.memory_space<vmem>>, %arg10: memref<1x1024xf32, #tpu.memory_space<vmem>>) attributes {dimension_semantics = [#tpu.dimension_semantics<parallel>], iteration_bounds = array<i64: 2>, scalar_prefetch = 0 : i64, scratch_operands = 0 : i64, tpu.core_type = #tpu.core_type<tc>, window_params = [{transform_indices = @transform_0, window_bounds = array<i64: 2, 1024>}, {pipeline_mode = #tpu.pipeline_mode<synchronous>, transform_indices = @transform_1, window_bounds = array<i64: 32, 2>}, {pipeline_mode = #tpu.pipeline_mode<synchronous>, transform_indices = @transform_2, window_bounds = array<i64: 32, 1>}, {pipeline_mode = #tpu.pipeline_mode<synchronous>, transform_indices = @transform_3, window_bounds = array<i64: 32, 32>}, {pipeline_mode = #tpu.pipeline_mode<synchronous>, transform_indices = @transform_4, window_bounds = array<i64: 32, 1>}, {pipeline_mode = #tpu.pipeline_mode<synchronous>, transform_indices = @transform_5, window_bounds = array<i64: 32, 32>}, {pipeline_mode = #tpu.pipeline_mode<synchronous>, transform_indices = @transform_6, window_bounds = array<i64: 32, 1>}, {pipeline_mode = #tpu.pipeline_mode<synchronous>, transform_indices = @transform_7, window_bounds = array<i64: 32, 1>}, {pipeline_mode = #tpu.pipeline_mode<synchronous>, transform_indices = @transform_8, window_bounds = array<i64: 1, 1>}, {transform_indices = @transform_9, window_bounds = array<i64: 1, 1024>}]} {
    %c0_i32 = arith.constant 0 : i32
    %c2_i32 = arith.constant 2 : i32
    %0 = arith.addi %c0_i32, %c2_i32 : i32
    %c1_i32 = arith.constant 1 : i32
    scf.for %arg11 = %c0_i32 to %0 step %c1_i32  : i32 {
      %c1_i32_1 = arith.constant 1 : i32
      %1 = arith.muli %arg11, %c1_i32_1 : i32
      %c0_i32_2 = arith.constant 0 : i32
      %2 = arith.addi %c0_i32_2, %1 : i32
      %c512_i32 = arith.constant 512 : i32
      %3 = arith.muli %2, %c512_i32 : i32
      %4 = tpu.assume_multiple %3, 128 : i32
      %c0 = arith.constant 0 : index
      %5 = arith.index_cast %4 : i32 to index
      %6 = vector.load %arg1[%c0, %5] : memref<2x1024xf32, #tpu.memory_space<vmem>>, vector<2x512xf32>
      %c0_3 = arith.constant 0 : index
      %c0_4 = arith.constant 0 : index
      %7 = vector.load %arg2[%c0_3, %c0_4] : memref<32x2xf32, #tpu.memory_space<vmem>>, vector<32x2xf32>
      %c0_5 = arith.constant 0 : index
      %c0_6 = arith.constant 0 : index
      %8 = vector.load %arg3[%c0_5, %c0_6] : memref<32x1xf32, #tpu.memory_space<vmem>>, vector<32x1xf32>
      %9 = vector.extract_strided_slice %7 {offsets = [0, 0], sizes = [32, 1], strides = [1, 1]} : vector<32x2xf32> to vector<32x1xf32>
      %10 = vector.extract_strided_slice %6 {offsets = [0, 0], sizes = [1, 512], strides = [1, 1]} : vector<2x512xf32> to vector<1x512xf32>
      %11 = vector.broadcast %9 : vector<32x1xf32> to vector<32x512xf32>
      %12 = vector.broadcast %10 : vector<1x512xf32> to vector<32x512xf32>
      %13 = arith.mulf %11, %12 : vector<32x512xf32>
      %14 = vector.broadcast %8 : vector<32x1xf32> to vector<32x512xf32>
      %15 = arith.addf %14, %13 : vector<32x512xf32>
      %16 = vector.extract_strided_slice %7 {offsets = [0, 1], sizes = [32, 1], strides = [1, 1]} : vector<32x2xf32> to vector<32x1xf32>
      %17 = vector.extract_strided_slice %6 {offsets = [1, 0], sizes = [1, 512], strides = [1, 1]} : vector<2x512xf32> to vector<1x512xf32>
      %18 = vector.broadcast %16 : vector<32x1xf32> to vector<32x512xf32>
      %19 = vector.broadcast %17 : vector<1x512xf32> to vector<32x512xf32>
      %20 = arith.mulf %18, %19 : vector<32x512xf32>
      %21 = arith.addf %15, %20 : vector<32x512xf32>
      %22 = math.tanh %21 : vector<32x512xf32>
      %c0_7 = arith.constant 0 : index
      %c0_8 = arith.constant 0 : index
      %23 = vector.load %arg4[%c0_7, %c0_8] : memref<32x32xf32, #tpu.memory_space<vmem>>, vector<32x32xf32>
      %c0_9 = arith.constant 0 : index
      %c0_10 = arith.constant 0 : index
      %24 = vector.load %arg5[%c0_9, %c0_10] : memref<32x1xf32, #tpu.memory_space<vmem>>, vector<32x1xf32>
      %cst = arith.constant dense<0.000000e+00> : vector<32x512xf32>
      %25 = tpu.matmul %23, %22, %cst {dimension_numbers = #tpu.dot_dimension_numbers<[1], [0], [0], [1], [0, 0, 1, 1], [], []>} : vector<32x32xf32>, vector<32x512xf32>, vector<32x512xf32> -> vector<32x512xf32>
      %26 = vector.broadcast %24 : vector<32x1xf32> to vector<32x512xf32>
      %27 = arith.addf %25, %26 : vector<32x512xf32>
      %28 = math.tanh %27 : vector<32x512xf32>
      %c0_11 = arith.constant 0 : index
      %c0_12 = arith.constant 0 : index
      %29 = vector.load %arg6[%c0_11, %c0_12] : memref<32x32xf32, #tpu.memory_space<vmem>>, vector<32x32xf32>
      %c0_13 = arith.constant 0 : index
      %c0_14 = arith.constant 0 : index
      %30 = vector.load %arg7[%c0_13, %c0_14] : memref<32x1xf32, #tpu.memory_space<vmem>>, vector<32x1xf32>
      %cst_15 = arith.constant dense<0.000000e+00> : vector<32x512xf32>
      %31 = tpu.matmul %29, %28, %cst_15 {dimension_numbers = #tpu.dot_dimension_numbers<[1], [0], [0], [1], [0, 0, 1, 1], [], []>} : vector<32x32xf32>, vector<32x512xf32>, vector<32x512xf32> -> vector<32x512xf32>
      %32 = vector.broadcast %30 : vector<32x1xf32> to vector<32x512xf32>
      %33 = arith.addf %31, %32 : vector<32x512xf32>
      %34 = math.tanh %33 : vector<32x512xf32>
      %c0_16 = arith.constant 0 : index
      %c0_17 = arith.constant 0 : index
      %35 = vector.load %arg8[%c0_16, %c0_17] : memref<32x1xf32, #tpu.memory_space<vmem>>, vector<32x1xf32>
      %c0_18 = arith.constant 0 : index
      %c0_19 = arith.constant 0 : index
      %36 = vector.load %arg9[%c0_18, %c0_19] : memref<1x1xf32, #tpu.memory_space<vmem>>, vector<1x1xf32>
      %37 = vector.broadcast %35 : vector<32x1xf32> to vector<32x512xf32>
      %38 = arith.mulf %37, %34 : vector<32x512xf32>
      %cst_20 = arith.constant dense<0.000000e+00> : vector<512xf32>
      %39 = vector.multi_reduction <add>, %38, %cst_20 [0] : vector<32x512xf32> to vector<512xf32>
      %40 = vector.shape_cast %39 : vector<512xf32> to vector<1x512xf32>
      %41 = vector.broadcast %36 : vector<1x1xf32> to vector<1x512xf32>
      %42 = arith.addf %40, %41 : vector<1x512xf32>
      %cst_21 = arith.constant 0.000000e+00 : f32
      %43 = vector.broadcast %cst_21 : f32 to vector<1x512xf32>
      %44 = arith.maximumf %42, %43 : vector<1x512xf32>
      %45 = vector.broadcast %cst_21 : f32 to vector<1x512xf32>
      %46 = arith.subf %42, %45 : vector<1x512xf32>
      %47 = arith.cmpf one, %46, %46 : vector<1x512xf32>
      %48 = vector.broadcast %cst_21 : f32 to vector<1x512xf32>
      %49 = arith.addf %42, %48 : vector<1x512xf32>
      %50 = math.absf %46 : vector<1x512xf32>
      %cst_22 = arith.constant 0.000000e+00 : f32
      %51 = vector.broadcast %cst_22 : f32 to vector<1x512xf32>
      %52 = arith.subf %51, %50 : vector<1x512xf32>
      %53 = math.exp %52 : vector<1x512xf32>
      %54 = math.log1p %53 : vector<1x512xf32>
      %55 = arith.addf %44, %54 : vector<1x512xf32>
      %56 = arith.select %47, %49, %55 : vector<1x512xi1>, vector<1x512xf32>
      %c0_23 = arith.constant 0 : index
      %57 = arith.index_cast %4 : i32 to index
      %58 = vector.load %arg10[%c0_23, %57] : memref<1x1024xf32, #tpu.memory_space<vmem>>, vector<1x512xf32>
      tpu.vector_store %arg10[%c0_23, %57], %56 {strides = array<i32>} : memref<1x1024xf32, #tpu.memory_space<vmem>>, vector<1x512xf32>,
    }
    %c2_i32_0 = arith.constant 2 : i32
    return
  }
  func.func @transform_0(%arg0: i32) -> (i32, i32) {
    %c0_i32 = arith.constant 0 : i32
    %c0_i32_0 = arith.constant 0 : i32
    return %c0_i32, %arg0 : i32, i32
  }
  func.func @transform_1(%arg0: i32) -> (i32, i32) {
    %c0_i32 = arith.constant 0 : i32
    %c0_i32_0 = arith.constant 0 : i32
    %c0_i32_1 = arith.constant 0 : i32
    return %c0_i32, %c0_i32_0 : i32, i32
  }
  func.func @transform_2(%arg0: i32) -> (i32, i32) {
    %c0_i32 = arith.constant 0 : i32
    %c0_i32_0 = arith.constant 0 : i32
    %c0_i32_1 = arith.constant 0 : i32
    return %c0_i32, %c0_i32_0 : i32, i32
  }
  func.func @transform_3(%arg0: i32) -> (i32, i32) {
    %c0_i32 = arith.constant 0 : i32
    %c0_i32_0 = arith.constant 0 : i32
    %c0_i32_1 = arith.constant 0 : i32
    return %c0_i32, %c0_i32_0 : i32, i32
  }
  func.func @transform_4(%arg0: i32) -> (i32, i32) {
    %c0_i32 = arith.constant 0 : i32
    %c0_i32_0 = arith.constant 0 : i32
    %c0_i32_1 = arith.constant 0 : i32
    return %c0_i32, %c0_i32_0 : i32, i32
  }
  func.func @transform_5(%arg0: i32) -> (i32, i32) {
    %c0_i32 = arith.constant 0 : i32
    %c0_i32_0 = arith.constant 0 : i32
    %c0_i32_1 = arith.constant 0 : i32
    return %c0_i32, %c0_i32_0 : i32, i32
  }
  func.func @transform_6(%arg0: i32) -> (i32, i32) {
    %c0_i32 = arith.constant 0 : i32
    %c0_i32_0 = arith.constant 0 : i32
    %c0_i32_1 = arith.constant 0 : i32
    return %c0_i32, %c0_i32_0 : i32, i32
  }
  func.func @transform_7(%arg0: i32) -> (i32, i32) {
    %c0_i32 = arith.constant 0 : i32
    %c0_i32_0 = arith.constant 0 : i32
    %c0_i32_1 = arith.constant 0 : i32
    return %c0_i32, %c0_i32_0 : i32, i32
  }
  func.func @transform_8(%arg0: i32) -> (i32, i32) {
    %c0_i32 = arith.constant 0 : i32
    %c0_i32_0 = arith.constant 0 : i32
    %c0_i32_1 = arith.constant 0 : i32
    return %c0_i32, %c0_i32_0 : i32, i32
  }
  func.func @transform_9(%arg0: i32) -> (i32, i32) {
    %c0_i32 = arith.constant 0 : i32
    %c0_i32_0 = arith.constant 0 : i32
    return %c0_i32, %arg0 : i32, i32
  }
}

</mosaic_0001>

<llo_original>
// kernel: tpu_custom_call.1
$region0: #{tpu_custom_call.1}
  #allocation0 [shape = 'u32[]', space=smem, size = 0x4, offset = 0x4, fixed_abs, tag = 'smem constant byte address 0x4 - core index']
  #allocation1 [shape = 'u32[144,128]{1,0:T(1,128)}', space=vmem, size = 0x12000, scoped, tag = 'internal scratch']
  #allocation2 [shape = 'f32[1,1]{1,0:T(1,128)S(1)}', space=vmem, size = 0x200, scoped, tag = 'scoped memory for tpu_custom_call.1']
  %s0 = inlined_call_operand.vmem [shape: f32[2,2048], index: 0, kind: input, shape index: {}]
  %s1 = inlined_call_operand.vmem [shape: f32[32,2], index: 1, kind: input, shape index: {}]
  %s2 = inlined_call_operand.vmem [shape: f32[32,1], index: 2, kind: input, shape index: {}]
  %s3 = inlined_call_operand.vmem [shape: f32[32,32], index: 3, kind: input, shape index: {}]
  %s4 = inlined_call_operand.vmem [shape: f32[32,1], index: 4, kind: input, shape index: {}]
  %s5 = inlined_call_operand.vmem [shape: f32[32,32], index: 5, kind: input, shape index: {}]
  %s6 = inlined_call_operand.vmem [shape: f32[32,1], index: 6, kind: input, shape index: {}]
  %s7 = inlined_call_operand.vmem [shape: f32[32,1], index: 7, kind: input, shape index: {}]
  %s8 = inlined_call_operand.<no memory space> [shape: f32[1,1], index: 8, kind: input, shape index: {}]
  %s9 = inlined_call_operand.hbm [shape: f32[1,2048], index: 9, kind: output, shape index: {}]
  %s10 = sld [smem:[#allocation0]]
  $region76: #{tpu_custom_call.1} parent=0
    _
  %s12 = ssub.s32 1, %s10
  %s13 = scalar_select 0, %s12, %s10
  %v14 = vstv %s8
  %15 = vst [vmem:[#allocation2] sm:$0x1] %v14
  $region1: #{tpu_custom_call.1} parent=0
    #allocation3 [shape = 'u8[8192]{0}', space=vmem, size = 0x2000, scoped, tag = 'output window, operand 0']
    #allocation4 [shape = 's32[2]{0}', space=sflag, size = 0x8, scoped, tag = 'scoped memory for tpu_custom_call.1']
    %16 = vsyncpa [#allocation4], 0
    %s17 = scalar_lea.sflag [#allocation4], 1
    %18 = vsyncpa %s17, 0
    loop: start=0, step=1, limit=4
    $region2: #{tpu_custom_call.1} parent=1 // loop_pre_header
      _
    $region3: #{tpu_custom_call.1} parent=1 // loop_header
      %s20 = sphi 0, %s24
      %p21 = scmp.ge.s32.totalorder %s20, 4
      %s30 = sphi 0, %s32
      %s33 = sphi 0, %s30
      %s34 = sphi 0, %s33
      %s50 = sphi 0, %s34
      %s54 = sphi 0, %s54
      %s56 = sphi 0, %s54
      %s57 = sphi 0, %s56
      %s71 = sphi 0, %s57
      %s75 = sphi 0, %s75
      %s77 = sphi 0, %s75
      %s78 = sphi 0, %s77
      %s92 = sphi 0, %s78
      %s96 = sphi 0, %s96
      %s98 = sphi 0, %s96
      %s99 = sphi 0, %s98
      %s113 = sphi 0, %s99
      %s117 = sphi 0, %s117
      %s119 = sphi 0, %s117
      %s120 = sphi 0, %s119
      %s134 = sphi 0, %s120
      %s138 = sphi 0, %s138
      %s140 = sphi 0, %s138
      %s141 = sphi 0, %s140
      %s155 = sphi 0, %s141
      %s159 = sphi 0, %s159
      %s161 = sphi 0, %s159
      %s162 = sphi 0, %s161
      %s176 = sphi 0, %s162
      %s180 = sphi 0, %s180
      %s182 = sphi 0, %s180
      %s183 = sphi 0, %s182
      %s197 = sphi 0, %s183
      %s201 = sphi 0, %s201
      %s203 = sphi 0, %s201
      %s204 = sphi 0, %s203
      %s218 = sphi 0, %s204
      %s224 = sphi 0, %s226
      %s227 = sphi 0, %s224
      %s228 = sphi 0, %s227
      %s244 = sphi 0, %s228
    $region4: #{tpu_custom_call.1} parent=1 // loop_header_branch
      %23 = sbr.rel (%p21) target = $region8
    $region5: #{tpu_custom_call.1} parent=1 // loop_body
      %s25 = ssub.s32 %s20, 1
      %s26 = ssub.s32 %s20, 2
      %s27 = sadd.s32 %s20, 1
      %s28 = ssub.s32 %s20, %s27
      %p29 = scmp.eq.s32.totalorder %s28, 0
      %s31 = sadd.s32 %s30, 1
      %s32 = scalar_select %p29, %s30, %s31
      %p35 = pneg %p29
      %p36 = scmp.eq.s32.totalorder %s20, 1
      %p37 = por %p35, %p36
      %p38 = scmp.ne.s32.totalorder %s30, %s33
      %p39 = scmp.eq.s32.totalorder %s20, 0
      %p40 = por %p38, %p39
      %p41 = scmp.ne.s32.totalorder %s30, %s33
      %p42 = scmp.eq.s32.totalorder %s25, 1
      %p43 = por %p41, %p42
      %p44 = scmp.ne.s32.totalorder %s33, %s34
      %p45 = scmp.eq.s32.totalorder %s25, 0
      %p46 = por %p44, %p45
      %p47 = scmp.ne.s32.totalorder %s33, %s34
      %p48 = scmp.eq.s32.totalorder %s26, 1
      %p49 = por %p47, %p48
      %p51 = scmp.ne.s32.totalorder %s34, %s50
      %p52 = scmp.eq.s32.totalorder %s26, 0
      %p53 = por %p51, %p52
      %s55 = sadd.s32 %s54, 1
      %p58 = scmp.eq.s32.totalorder %s20, 1
      %p59 = scmp.ne.s32.totalorder %s54, %s56
      %p60 = scmp.eq.s32.totalorder %s20, 0
      %p61 = por %p59, %p60
      %p62 = scmp.ne.s32.totalorder %s54, %s56
      %p63 = scmp.eq.s32.totalorder %s25, 1
      %p64 = por %p62, %p63
      %p65 = scmp.ne.s32.totalorder %s56, %s57
      %p66 = scmp.eq.s32.totalorder %s25, 0
      %p67 = por %p65, %p66
      %p68 = scmp.ne.s32.totalorder %s56, %s57
      %p69 = scmp.eq.s32.totalorder %s26, 1
      %p70 = por %p68, %p69
      %p72 = scmp.ne.s32.totalorder %s57, %s71
      %p73 = scmp.eq.s32.totalorder %s26, 0
      %p74 = por %p72, %p73
      %s76 = sadd.s32 %s75, 1
      %p79 = scmp.eq.s32.totalorder %s20, 1
      %p80 = scmp.ne.s32.totalorder %s75, %s77
      %p81 = scmp.eq.s32.totalorder %s20, 0
      %p82 = por %p80, %p81
      %p83 = scmp.ne.s32.totalorder %s75, %s77
      %p84 = scmp.eq.s32.totalorder %s25, 1
      %p85 = por %p83, %p84
      %p86 = scmp.ne.s32.totalorder %s77, %s78
      %p87 = scmp.eq.s32.totalorder %s25, 0
      %p88 = por %p86, %p87
      %p89 = scmp.ne.s32.totalorder %s77, %s78
      %p90 = scmp.eq.s32.totalorder %s26, 1
      %p91 = por %p89, %p90
      %p93 = scmp.ne.s32.totalorder %s78, %s92
      %p94 = scmp.eq.s32.totalorder %s26, 0
      %p95 = por %p93, %p94
      %s97 = sadd.s32 %s96, 1
      %p100 = scmp.eq.s32.totalorder %s20, 1
      %p101 = scmp.ne.s32.totalorder %s96, %s98
      %p102 = scmp.eq.s32.totalorder %s20, 0
      %p103 = por %p101, %p102
      %p104 = scmp.ne.s32.totalorder %s96, %s98
      %p105 = scmp.eq.s32.totalorder %s25, 1
      %p106 = por %p104, %p105
      %p107 = scmp.ne.s32.totalorder %s98, %s99
      %p108 = scmp.eq.s32.totalorder %s25, 0
      %p109 = por %p107, %p108
      %p110 = scmp.ne.s32.totalorder %s98, %s99
      %p111 = scmp.eq.s32.totalorder %s26, 1
      %p112 = por %p110, %p111
      %p114 = scmp.ne.s32.totalorder %s99, %s113
      %p115 = scmp.eq.s32.totalorder %s26, 0
      %p116 = por %p114, %p115
      %s118 = sadd.s32 %s117, 1
      %p121 = scmp.eq.s32.totalorder %s20, 1
      %p122 = scmp.ne.s32.totalorder %s117, %s119
      %p123 = scmp.eq.s32.totalorder %s20, 0
      %p124 = por %p122, %p123
      %p125 = scmp.ne.s32.totalorder %s117, %s119
      %p126 = scmp.eq.s32.totalorder %s25, 1
      %p127 = por %p125, %p126
      %p128 = scmp.ne.s32.totalorder %s119, %s120
      %p129 = scmp.eq.s32.totalorder %s25, 0
      %p130 = por %p128, %p129
      %p131 = scmp.ne.s32.totalorder %s119, %s120
      %p132 = scmp.eq.s32.totalorder %s26, 1
      %p133 = por %p131, %p132
      %p135 = scmp.ne.s32.totalorder %s120, %s134
      %p136 = scmp.eq.s32.totalorder %s26, 0
      %p137 = por %p135, %p136
      %s139 = sadd.s32 %s138, 1
      %p142 = scmp.eq.s32.totalorder %s20, 1
      %p143 = scmp.ne.s32.totalorder %s138, %s140
      %p144 = scmp.eq.s32.totalorder %s20, 0
      %p145 = por %p143, %p144
      %p146 = scmp.ne.s32.totalorder %s138, %s140
      %p147 = scmp.eq.s32.totalorder %s25, 1
      %p148 = por %p146, %p147
      %p149 = scmp.ne.s32.totalorder %s140, %s141
      %p150 = scmp.eq.s32.totalorder %s25, 0
      %p151 = por %p149, %p150
      %p152 = scmp.ne.s32.totalorder %s140, %s141
      %p153 = scmp.eq.s32.totalorder %s26, 1
      %p154 = por %p152, %p153
      %p156 = scmp.ne.s32.totalorder %s141, %s155
      %p157 = scmp.eq.s32.totalorder %s26, 0
      %p158 = por %p156, %p157
      %s160 = sadd.s32 %s159, 1
      %p163 = scmp.eq.s32.totalorder %s20, 1
      %p164 = scmp.ne.s32.totalorder %s159, %s161
      %p165 = scmp.eq.s32.totalorder %s20, 0
      %p166 = por %p164, %p165
      %p167 = scmp.ne.s32.totalorder %s159, %s161
      %p168 = scmp.eq.s32.totalorder %s25, 1
      %p169 = por %p167, %p168
      %p170 = scmp.ne.s32.totalorder %s161, %s162
      %p171 = scmp.eq.s32.totalorder %s25, 0
      %p172 = por %p170, %p171
      %p173 = scmp.ne.s32.totalorder %s161, %s162
      %p174 = scmp.eq.s32.totalorder %s26, 1
      %p175 = por %p173, %p174
      %p177 = scmp.ne.s32.totalorder %s162, %s176
      %p178 = scmp.eq.s32.totalorder %s26, 0
      %p179 = por %p177, %p178
      %s181 = sadd.s32 %s180, 1
      %p184 = scmp.eq.s32.totalorder %s20, 1
      %p185 = scmp.ne.s32.totalorder %s180, %s182
      %p186 = scmp.eq.s32.totalorder %s20, 0
      %p187 = por %p185, %p186
      %p188 = scmp.ne.s32.totalorder %s180, %s182
      %p189 = scmp.eq.s32.totalorder %s25, 1
      %p190 = por %p188, %p189
      %p191 = scmp.ne.s32.totalorder %s182, %s183
      %p192 = scmp.eq.s32.totalorder %s25, 0
      %p193 = por %p191, %p192
      %p194 = scmp.ne.s32.totalorder %s182, %s183
      %p195 = scmp.eq.s32.totalorder %s26, 1
      %p196 = por %p194, %p195
      %p198 = scmp.ne.s32.totalorder %s183, %s197
      %p199 = scmp.eq.s32.totalorder %s26, 0
      %p200 = por %p198, %p199
      %s202 = sadd.s32 %s201, 1
      %p205 = scmp.eq.s32.totalorder %s20, 1
      %p206 = scmp.ne.s32.totalorder %s201, %s203
      %p207 = scmp.eq.s32.totalorder %s20, 0
      %p208 = por %p206, %p207
      %p209 = scmp.ne.s32.totalorder %s201, %s203
      %p210 = scmp.eq.s32.totalorder %s25, 1
      %p211 = por %p209, %p210
      %p212 = scmp.ne.s32.totalorder %s203, %s204
      %p213 = scmp.eq.s32.totalorder %s25, 0
      %p214 = por %p212, %p213
      %p215 = scmp.ne.s32.totalorder %s203, %s204
      %p216 = scmp.eq.s32.totalorder %s26, 1
      %p217 = por %p215, %p216
      %p219 = scmp.ne.s32.totalorder %s204, %s218
      %p220 = scmp.eq.s32.totalorder %s26, 0
      %p221 = por %p219, %p220
      %s222 = ssub.s32 %s20, %s27
      %p223 = scmp.eq.s32.totalorder %s222, 0
      %s225 = sadd.s32 %s224, 1
      %s226 = scalar_select %p223, %s224, %s225
      %p229 = pneg %p223
      %p230 = scmp.eq.s32.totalorder %s20, 1
      %p231 = por %p229, %p230
      %p232 = scmp.ne.s32.totalorder %s224, %s227
      %p233 = scmp.eq.s32.totalorder %s20, 0
      %p234 = por %p232, %p233
      %p235 = scmp.ne.s32.totalorder %s224, %s227
      %p236 = scmp.eq.s32.totalorder %s25, 1
      %p237 = por %p235, %p236
      %p238 = scmp.ne.s32.totalorder %s227, %s228
      %p239 = scmp.eq.s32.totalorder %s25, 0
      %p240 = por %p238, %p239
      %p241 = scmp.ne.s32.totalorder %s227, %s228
      %p242 = scmp.eq.s32.totalorder %s26, 1
      %p243 = por %p241, %p242
      %p245 = scmp.ne.s32.totalorder %s228, %s244
      %p246 = scmp.eq.s32.totalorder %s26, 0
      %p247 = por %p245, %p246
      %p248 = scmp.le.s32.totalorder 1, %s20
      %p249 = scmp.lt.s32.totalorder %s20, 3
      %p250 = pnand %p248, %p249
      %p251 = pneg %p250
      // Predicated region
      $region9: #{tpu_custom_call.1} parent=5 // pred_check
        _
      $region10: #{tpu_custom_call.1} parent=5 // pred_check_branch
        %253 = sbr.rel (%p250) target = $region12
      $region11: #{tpu_custom_call.1} parent=5 // pred_region
        %s254 = ssub.s32 %s20, 1
        // Predicated region
        $region13: #{tpu_custom_call.1} parent=11 // pred_check
          %p255 = pneg %p67
        $region14: #{tpu_custom_call.1} parent=11 // pred_check_branch
          %257 = sbr.rel (%p255) target = $region16
        $region15: #{tpu_custom_call.1} parent=11 // pred_region
          _
        $region16: #{tpu_custom_call.1} parent=11 // pred_fallthru
          _
        // Predicated region
        $region17: #{tpu_custom_call.1} parent=11 // pred_check
          %p258 = pneg %p88
        $region18: #{tpu_custom_call.1} parent=11 // pred_check_branch
          %260 = sbr.rel (%p258) target = $region20
        $region19: #{tpu_custom_call.1} parent=11 // pred_region
          _
        $region20: #{tpu_custom_call.1} parent=11 // pred_fallthru
          _
        // Predicated region
        $region21: #{tpu_custom_call.1} parent=11 // pred_check
          %p261 = pneg %p109
        $region22: #{tpu_custom_call.1} parent=11 // pred_check_branch
          %263 = sbr.rel (%p261) target = $region24
        $region23: #{tpu_custom_call.1} parent=11 // pred_region
          _
        $region24: #{tpu_custom_call.1} parent=11 // pred_fallthru
          _
        // Predicated region
        $region25: #{tpu_custom_call.1} parent=11 // pred_check
          %p264 = pneg %p130
        $region26: #{tpu_custom_call.1} parent=11 // pred_check_branch
          %266 = sbr.rel (%p264) target = $region28
        $region27: #{tpu_custom_call.1} parent=11 // pred_region
          _
        $region28: #{tpu_custom_call.1} parent=11 // pred_fallthru
          _
        // Predicated region
        $region29: #{tpu_custom_call.1} parent=11 // pred_check
          %p267 = pneg %p151
        $region30: #{tpu_custom_call.1} parent=11 // pred_check_branch
          %269 = sbr.rel (%p267) target = $region32
        $region31: #{tpu_custom_call.1} parent=11 // pred_region
          _
        $region32: #{tpu_custom_call.1} parent=11 // pred_fallthru
          _
        // Predicated region
        $region33: #{tpu_custom_call.1} parent=11 // pred_check
          %p270 = pneg %p172
        $region34: #{tpu_custom_call.1} parent=11 // pred_check_branch
          %272 = sbr.rel (%p270) target = $region36
        $region35: #{tpu_custom_call.1} parent=11 // pred_region
          _
        $region36: #{tpu_custom_call.1} parent=11 // pred_fallthru
          _
        // Predicated region
        $region37: #{tpu_custom_call.1} parent=11 // pred_check
          %p273 = pneg %p193
        $region38: #{tpu_custom_call.1} parent=11 // pred_check_branch
          %275 = sbr.rel (%p273) target = $region40
        $region39: #{tpu_custom_call.1} parent=11 // pred_region
          _
        $region40: #{tpu_custom_call.1} parent=11 // pred_fallthru
          _
        // Predicated region
        $region41: #{tpu_custom_call.1} parent=11 // pred_check
          %p276 = pneg %p214
        $region42: #{tpu_custom_call.1} parent=11 // pred_check_branch
          %278 = sbr.rel (%p276) target = $region44
        $region43: #{tpu_custom_call.1} parent=11 // pred_region
          _
        $region44: #{tpu_custom_call.1} parent=11 // pred_fallthru
          _
      $region12: #{tpu_custom_call.1} parent=5 // pred_fallthru
        _
      %p279 = scmp.lt.s32.totalorder %s20, 2
      // Predicated region
      $region45: #{tpu_custom_call.1} parent=5 // pred_check
        %p280 = pneg %p279
      $region46: #{tpu_custom_call.1} parent=5 // pred_check_branch
        %282 = sbr.rel (%p280) target = $region48
      $region47: #{tpu_custom_call.1} parent=5 // pred_region
        // Predicated region
        $region49: #{tpu_custom_call.1} parent=47 // pred_check
          %p283 = pneg %p40
        $region50: #{tpu_custom_call.1} parent=47 // pred_check_branch
          %285 = sbr.rel (%p283) target = $region52
        $region51: #{tpu_custom_call.1} parent=47 // pred_region
          %s286 = smul.u32 8, %s20
          %p287 = scmp.lt.s32.totalorder %s286, 15
          %s288 = scalar_select %p287, %s286, 15
          %s289 = smul.addr %s288, 2
          %s290 = scalar_lea.vmem %s0, %s289
          %s291 = smul.u32 8, %s20
        $region52: #{tpu_custom_call.1} parent=47 // pred_fallthru
          _
      $region48: #{tpu_custom_call.1} parent=5 // pred_fallthru
        _
      %p292 = scmp.le.s32.totalorder 1, %s20
      %p293 = scmp.lt.s32.totalorder %s20, 3
      %p294 = pnand %p292, %p293
      %p295 = pneg %p294
      // Predicated region
      $region53: #{tpu_custom_call.1} parent=5 // pred_check
        _
      $region54: #{tpu_custom_call.1} parent=5 // pred_check_branch
        %297 = sbr.rel (%p294) target = $region56
      $region55: #{tpu_custom_call.1} parent=5 // pred_region
        %s298 = ssub.s32 %s20, 1
        %s299 = smul.u32 8, %s25
        %p300 = scmp.lt.s32.totalorder %s299, 15
        %s301 = scalar_select %p300, %s299, 15
        %s302 = smul.addr %s301, 2
        %s303 = scalar_lea.vmem %s0, %s302
        %p304 = pneg %p46
        %p305 = pneg %p43
        %p306 = pneg %p67
        %p307 = pneg %p64
        %p308 = pneg %p88
        %p309 = pneg %p85
        %p310 = pneg %p109
        %p311 = pneg %p106
        %p312 = pneg %p130
        %p313 = pneg %p127
        %p314 = pneg %p151
        %p315 = pneg %p148
        %p316 = pneg %p172
        %p317 = pneg %p169
        %p318 = pneg %p193
        %p319 = pneg %p190
        %p320 = pneg %p214
        %p321 = pneg %p211
        %p322 = pneg %p240
        %p323 = pneg %p237
        %s324 = sand.u32 %s227, 1
        %s325 = scalar_lea.sflag [#allocation4], %s324
        %s326 = sand.u32 %s227, 1
        %s327 = smul.addr %s326, 8
        %s328 = scalar_lea.vmem [#allocation3], %s327
        %s329 = smul.u32 8, %s25
        %p330 = scmp.lt.s32.totalorder %s329, 15
        %s331 = scalar_select %p330, %s329, 15
        %s332 = smul.addr %s331, 2
        %s333 = scalar_lea.vmem %s0, %s332
        %s334 = smul.u32 8, %s25
        %s335 = smul.u32 8, %s25
        loop: start=0, step=1, limit=2
        $region57: #{tpu_custom_call.1} parent=55 // loop_pre_header
          _
        $region58: #{tpu_custom_call.1} parent=55 // loop_header
          %s337 = sphi 0, %s341
          %p338 = scmp.ge.s32.totalorder %s337, 2
        $region59: #{tpu_custom_call.1} parent=55 // loop_header_branch
          %340 = sbr.rel (%p338) target = $region63
        $region60: #{tpu_custom_call.1} parent=55 // loop_body
          %s342 = smul.u32 %s337, 512
          %s343 = sshra.s32 %s342, 7
          %s344 = sand.u32 %s342, 127
          %s345 = smul.addr %s343, 2
          %s346 = scalar_lea.vmem %s333, %s345
          %v347 = vld [vmem:[%s346] sm:$0xff]
          %v348 = vld [vmem:[%s1] sm:$0xff]
          %v349 = vld [vmem:[%s1 + $0x8] sm:$0xff]
          %v350 = vld [vmem:[%s1 + $0x10] sm:$0xff]
          %v351 = vld [vmem:[%s1 + $0x18] sm:$0xff]
          %v352 = vld [vmem:[%s2] sm:$0xff]
          %v353 = vld [vmem:[%s2 + $0x8] sm:$0xff]
          %v354 = vld [vmem:[%s2 + $0x10] sm:$0xff]
          %v355 = vld [vmem:[%s2 + $0x18] sm:$0xff]
          %357 = vset.pattern.permute.xlu0 0
          %358 = vperm.xlu0 %357, %v348
          %v359 = vpop.permute.xlu0 %358
          %362 = vset.pattern.permute.xlu0 0
          %363 = vperm.xlu0 %362, %v349
          %v364 = vpop.permute.xlu0 %363
          %367 = vset.pattern.permute.xlu0 0
          %368 = vperm.xlu0 %367, %v350
          %v369 = vpop.permute.xlu0 %368
          %372 = vset.pattern.permute.xlu0 0
          %373 = vperm.xlu0 %372, %v351
          %v374 = vpop.permute.xlu0 %373
          %v377 = vlaneseq
          %v378 = vshrl.u32 %v377, 7
          %v379 = vsub.s32 0, %v378
          %v380 = vrot.slane %v347, %v379
          %v381 = vlaneseq
          %v382 = vshrl.u32 %v381, 7
          %v383 = vsub.s32 2, %v382
          %v384 = vrot.slane %v347, %v383
          %v385 = vlaneseq
          %v386 = vshrl.u32 %v385, 7
          %v387 = vsub.s32 4, %v386
          %v388 = vrot.slane %v347, %v387
          %v389 = vlaneseq
          %v390 = vshrl.u32 %v389, 7
          %v391 = vsub.s32 6, %v390
          %v392 = vrot.slane %v347, %v391
          %v397 = vlaneseq
          %v398 = vshrl.u32 %v397, 7
          %v399 = vsub.s32 0, %v398
          %v400 = vrot.slane %v380, %v399
          %v401 = vlaneseq
          %v402 = vshrl.u32 %v401, 7
          %v403 = vsub.s32 0, %v402
          %v404 = vrot.slane %v384, %v403
          %v405 = vlaneseq
          %v406 = vshrl.u32 %v405, 7
          %v407 = vsub.s32 0, %v406
          %v408 = vrot.slane %v388, %v407
          %v409 = vlaneseq
          %v410 = vshrl.u32 %v409, 7
          %v411 = vsub.s32 0, %v410
          %v412 = vrot.slane %v392, %v411
          %v413 = vmul.f32 %v359, %v400
          %v414 = vmul.f32 %v359, %v404
          %v415 = vmul.f32 %v359, %v408
          %v416 = vmul.f32 %v359, %v412
          %v417 = vmul.f32 %v364, %v400
          %v418 = vmul.f32 %v364, %v404
          %v419 = vmul.f32 %v364, %v408
          %v420 = vmul.f32 %v364, %v412
          %v421 = vmul.f32 %v369, %v400
          %v422 = vmul.f32 %v369, %v404
          %v423 = vmul.f32 %v369, %v408
          %v424 = vmul.f32 %v369, %v412
          %v425 = vmul.f32 %v374, %v400
          %v426 = vmul.f32 %v374, %v404
          %v427 = vmul.f32 %v374, %v408
          %v428 = vmul.f32 %v374, %v412
          %430 = vset.pattern.permute.xlu0 0
          %431 = vperm.xlu0 %430, %v352
          %v432 = vpop.permute.xlu0 %431
          %435 = vset.pattern.permute.xlu0 0
          %436 = vperm.xlu0 %435, %v353
          %v437 = vpop.permute.xlu0 %436
          %440 = vset.pattern.permute.xlu0 0
          %441 = vperm.xlu0 %440, %v354
          %v442 = vpop.permute.xlu0 %441
          %445 = vset.pattern.permute.xlu0 0
          %446 = vperm.xlu0 %445, %v355
          %v447 = vpop.permute.xlu0 %446
          %v449 = vadd.f32 %v432, %v413
          %v450 = vadd.f32 %v432, %v414
          %v451 = vadd.f32 %v432, %v415
          %v452 = vadd.f32 %v432, %v416
          %v453 = vadd.f32 %v437, %v417
          %v454 = vadd.f32 %v437, %v418
          %v455 = vadd.f32 %v437, %v419
          %v456 = vadd.f32 %v437, %v420
          %v457 = vadd.f32 %v442, %v421
          %v458 = vadd.f32 %v442, %v422
          %v459 = vadd.f32 %v442, %v423
          %v460 = vadd.f32 %v442, %v424
          %v461 = vadd.f32 %v447, %v425
          %v462 = vadd.f32 %v447, %v426
          %v463 = vadd.f32 %v447, %v427
          %v464 = vadd.f32 %v447, %v428
          %465 = vset.pattern.permute.xlu0 1
          %466 = vperm.xlu0 %465, %v348
          %v467 = vpop.permute.xlu0 %466
          %469 = vset.pattern.permute.xlu0 1
          %470 = vperm.xlu0 %469, %v349
          %v471 = vpop.permute.xlu0 %470
          %473 = vset.pattern.permute.xlu0 1
          %474 = vperm.xlu0 %473, %v350
          %v475 = vpop.permute.xlu0 %474
          %477 = vset.pattern.permute.xlu0 1
          %478 = vperm.xlu0 %477, %v351
          %v479 = vpop.permute.xlu0 %478
          %v481 = vlaneseq
          %v482 = vshrl.u32 %v481, 7
          %v483 = vsub.s32 1, %v482
          %v484 = vrot.slane %v347, %v483
          %v485 = vlaneseq
          %v486 = vshrl.u32 %v485, 7
          %v487 = vsub.s32 3, %v486
          %v488 = vrot.slane %v347, %v487
          %v489 = vlaneseq
          %v490 = vshrl.u32 %v489, 7
          %v491 = vsub.s32 5, %v490
          %v492 = vrot.slane %v347, %v491
          %v493 = vlaneseq
          %v494 = vshrl.u32 %v493, 7
          %v495 = vsub.s32 7, %v494
          %v496 = vrot.slane %v347, %v495
          %v501 = vlaneseq
          %v502 = vshrl.u32 %v501, 7
          %v503 = vsub.s32 1, %v502
          %v504 = vrot.slane %v484, %v503
          %v505 = vlaneseq
          %v506 = vshrl.u32 %v505, 7
          %v507 = vsub.s32 1, %v506
          %v508 = vrot.slane %v488, %v507
          %v509 = vlaneseq
          %v510 = vshrl.u32 %v509, 7
          %v511 = vsub.s32 1, %v510
          %v512 = vrot.slane %v492, %v511
          %v513 = vlaneseq
          %v514 = vshrl.u32 %v513, 7
          %v515 = vsub.s32 1, %v514
          %v516 = vrot.slane %v496, %v515
          %v517 = vmul.f32 %v467, %v504
          %v518 = vmul.f32 %v467, %v508
          %v519 = vmul.f32 %v467, %v512
          %v520 = vmul.f32 %v467, %v516
          %v521 = vmul.f32 %v471, %v504
          %v522 = vmul.f32 %v471, %v508
          %v523 = vmul.f32 %v471, %v512
          %v524 = vmul.f32 %v471, %v516
          %v525 = vmul.f32 %v475, %v504
          %v526 = vmul.f32 %v475, %v508
          %v527 = vmul.f32 %v475, %v512
          %v528 = vmul.f32 %v475, %v516
          %v529 = vmul.f32 %v479, %v504
          %v530 = vmul.f32 %v479, %v508
          %v531 = vmul.f32 %v479, %v512
          %v532 = vmul.f32 %v479, %v516
          %v533 = vadd.f32 %v449, %v517
          %v534 = vadd.f32 %v450, %v518
          %v535 = vadd.f32 %v451, %v519
          %v536 = vadd.f32 %v452, %v520
          %v537 = vadd.f32 %v453, %v521
          %v538 = vadd.f32 %v454, %v522
          %v539 = vadd.f32 %v455, %v523
          %v540 = vadd.f32 %v456, %v524
          %v541 = vadd.f32 %v457, %v525
          %v542 = vadd.f32 %v458, %v526
          %v543 = vadd.f32 %v459, %v527
          %v544 = vadd.f32 %v460, %v528
          %v545 = vadd.f32 %v461, %v529
          %v546 = vadd.f32 %v462, %v530
          %v547 = vadd.f32 %v463, %v531
          %v548 = vadd.f32 %v464, %v532
          %v549 = vtanh.pop %v533
          %v550 = vtanh.pop %v534
          %v551 = vtanh.pop %v535
          %v552 = vtanh.pop %v536
          %v553 = vtanh.pop %v537
          %v554 = vtanh.pop %v538
          %v555 = vtanh.pop %v539
          %v556 = vtanh.pop %v540
          %v557 = vtanh.pop %v541
          %v558 = vtanh.pop %v542
          %v559 = vtanh.pop %v543
          %v560 = vtanh.pop %v544
          %v561 = vtanh.pop %v545
          %v562 = vtanh.pop %v546
          %v563 = vtanh.pop %v547
          %v564 = vtanh.pop %v548
          %v565 = vld [vmem:[%s3] sm:$0xff]
          %v566 = vld [vmem:[%s3 + $0x8] sm:$0xff]
          %v567 = vld [vmem:[%s3 + $0x10] sm:$0xff]
          %v568 = vld [vmem:[%s3 + $0x18] sm:$0xff]
          %v569 = vld [vmem:[%s4] sm:$0xff]
          %v570 = vld [vmem:[%s4 + $0x8] sm:$0xff]
          %v571 = vld [vmem:[%s4 + $0x10] sm:$0xff]
          %v572 = vld [vmem:[%s4 + $0x18] sm:$0xff]
          %574 = vset.pattern.permute.xlu0 0
          %575 = vperm.xlu0 %574, %v569
          %v576 = vpop.permute.xlu0 %575
          %579 = vset.pattern.permute.xlu0 0
          %580 = vperm.xlu0 %579, %v570
          %v581 = vpop.permute.xlu0 %580
          %584 = vset.pattern.permute.xlu0 0
          %585 = vperm.xlu0 %584, %v571
          %v586 = vpop.permute.xlu0 %585
          %589 = vset.pattern.permute.xlu0 0
          %590 = vperm.xlu0 %589, %v572
          %v591 = vpop.permute.xlu0 %590
          %vm593 = vcmask 261120
          %v595 = vsel %vm593, %v565, 0
          %v598 = vsel %vm593, %v566, 0
          %v601 = vsel %vm593, %v567, 0
          %v604 = vsel %vm593, %v568, 0
          %606 = vmatprep.subr.mxu0 %v550
          %607 = vmatpush1.msra.mxu0 %v549
          %608 = vmatprep.subr.mxu0 %v554
          %609 = vmatpush1.msra.mxu0 %v553
          %610 = vmatprep.subr.mxu0 %v558
          %611 = vmatpush1.msra.mxu0 %v557
          %612 = vmatprep.subr.mxu0 %v562
          %613 = vmatpush1.msra.mxu0 %v561
          %614 = vmatprep.subr.mxu0 0.0
          %615 = vmatpush1.msra.mxu0 0.0
          %616 = vmatprep.subr.mxu0 0.0
          %617 = vmatpush1.msra.mxu0 0.0
          %618 = vmatprep.subr.mxu0 0.0
          %619 = vmatpush1.msra.mxu0 0.0
          %620 = vmatprep.subr.mxu0 0.0
          %621 = vmatpush1.msra.mxu0 0.0
          %622 = vmatprep.subr.mxu0 0.0
          %623 = vmatpush1.msra.mxu0 0.0
          %624 = vmatprep.subr.mxu0 0.0
          %625 = vmatpush1.msra.mxu0 0.0
          %626 = vmatprep.subr.mxu0 0.0
          %627 = vmatpush1.msra.mxu0 0.0
          %628 = vmatprep.subr.mxu0 0.0
          %629 = vmatpush1.msra.mxu0 0.0
          %630 = vmatprep.subr.mxu0 0.0
          %631 = vmatpush1.msra.mxu0 0.0
          %632 = vmatprep.subr.mxu0 0.0
          %633 = vmatpush1.msra.mxu0 0.0
          %634 = vmatprep.subr.mxu0 0.0
          %635 = vmatpush1.msra.mxu0 0.0
          %636 = vmatprep.subr.mxu0 0.0
          %637 = vmatpush1.msra.mxu0 0.0
          %638 = vmatprep.subr.mxu0 0.0
          %639 = vmatpush1.msra.mxu0 0.0
          %640 = vmatprep.subr.mxu0 0.0
          %641 = vmatpush1.msra.mxu0 0.0
          %642 = vmatprep.subr.mxu0 0.0
          %643 = vmatpush1.msra.mxu0 0.0
          %644 = vmatprep.subr.mxu0 0.0
          %645 = vmatpush1.msra.mxu0 0.0
          %646 = vmatprep.subr.mxu0 0.0
          %647 = vmatpush1.msra.mxu0 0.0
          %648 = vmatprep.subr.mxu0 0.0
          %649 = vmatpush1.msra.mxu0 0.0
          %650 = vmatprep.subr.mxu0 0.0
          %651 = vmatpush1.msra.mxu0 0.0
          %652 = vmatprep.subr.mxu0 0.0
          %653 = vmatpush1.msra.mxu0 0.0
          %654 = vmatprep.subr.mxu0 0.0
          %655 = vmatpush1.msra.mxu0 0.0
          %656 = vmatprep.subr.mxu0 0.0
          %657 = vmatpush1.msra.mxu0 0.0
          %658 = vmatprep.subr.mxu0 0.0
          %659 = vmatpush1.msra.mxu0 0.0
          %660 = vmatprep.subr.mxu0 0.0
          %661 = vmatpush1.msra.mxu0 0.0
          %662 = vmatprep.subr.mxu0 0.0
          %663 = vmatpush1.msra.mxu0 0.0
          %664 = vmatprep.subr.mxu0 0.0
          %665 = vmatpush1.msra.mxu0 0.0
          %666 = vmatprep.subr.mxu0 0.0
          %667 = vmatpush1.msra.mxu0 0.0
          %668 = vmatprep.subr.mxu0 0.0
          %669 = vmatpush1.msra.mxu0 0.0
          %670 = vmatprep.mubr.f32.mxu0 0.0
          %671 = vmatmul.mubr.f32.gmra.mrb[0].mxu0 %v595
          %v672 = vpop.f32.mrb[0].mxu0
          %v673 = vadd.f32 %v576, %v672
          %v674 = vpop.f32.mrb[0].mxu0
          %v675 = vadd.f32 %v576, %v674
          %676 = vmatprep.mubr.f32.mxu0 0.0
          %677 = vmatmul.mubr.f32.gmra.mrb[0].mxu0 %v598
          %v678 = vpop.f32.mrb[0].mxu0
          %v679 = vadd.f32 %v581, %v678
          %v680 = vpop.f32.mrb[0].mxu0
          %v681 = vadd.f32 %v581, %v680
          %682 = vmatprep.mubr.f32.mxu0 0.0
          %683 = vmatmul.mubr.f32.gmra.mrb[0].mxu0 %v601
          %v684 = vpop.f32.mrb[0].mxu0
          %v685 = vadd.f32 %v586, %v684
          %v686 = vpop.f32.mrb[0].mxu0
          %v687 = vadd.f32 %v586, %v686
          %688 = vmatprep.mubr.f32.mxu0 0.0
          %689 = vmatmul.mubr.f32.gmra.mrb[0].mxu0 %v604
          %v690 = vpop.f32.mrb[0].mxu0
          %v691 = vadd.f32 %v591, %v690
          %v692 = vpop.f32.mrb[0].mxu0
          %v693 = vadd.f32 %v591, %v692
          %694 = vdwg.mxu0
          %695 = vmatprep.subr.mxu0 %v552
          %696 = vmatpush1.msra.mxu0 %v551
          %697 = vmatprep.subr.mxu0 %v556
          %698 = vmatpush1.msra.mxu0 %v555
          %699 = vmatprep.subr.mxu0 %v560
          %700 = vmatpush1.msra.mxu0 %v559
          %701 = vmatprep.subr.mxu0 %v564
          %702 = vmatpush1.msra.mxu0 %v563
          %703 = vmatprep.subr.mxu0 0.0
          %704 = vmatpush1.msra.mxu0 0.0
          %705 = vmatprep.subr.mxu0 0.0
          %706 = vmatpush1.msra.mxu0 0.0
          %707 = vmatprep.subr.mxu0 0.0
          %708 = vmatpush1.msra.mxu0 0.0
          %709 = vmatprep.subr.mxu0 0.0
          %710 = vmatpush1.msra.mxu0 0.0
          %711 = vmatprep.subr.mxu0 0.0
          %712 = vmatpush1.msra.mxu0 0.0
          %713 = vmatprep.subr.mxu0 0.0
          %714 = vmatpush1.msra.mxu0 0.0
          %715 = vmatprep.subr.mxu0 0.0
          %716 = vmatpush1.msra.mxu0 0.0
          %717 = vmatprep.subr.mxu0 0.0
          %718 = vmatpush1.msra.mxu0 0.0
          %719 = vmatprep.subr.mxu0 0.0
          %720 = vmatpush1.msra.mxu0 0.0
          %721 = vmatprep.subr.mxu0 0.0
          %722 = vmatpush1.msra.mxu0 0.0
          %723 = vmatprep.subr.mxu0 0.0
          %724 = vmatpush1.msra.mxu0 0.0
          %725 = vmatprep.subr.mxu0 0.0
          %726 = vmatpush1.msra.mxu0 0.0
          %727 = vmatprep.subr.mxu0 0.0
          %728 = vmatpush1.msra.mxu0 0.0
          %729 = vmatprep.subr.mxu0 0.0
          %730 = vmatpush1.msra.mxu0 0.0
          %731 = vmatprep.subr.mxu0 0.0
          %732 = vmatpush1.msra.mxu0 0.0
          %733 = vmatprep.subr.mxu0 0.0
          %734 = vmatpush1.msra.mxu0 0.0
          %735 = vmatprep.subr.mxu0 0.0
          %736 = vmatpush1.msra.mxu0 0.0
          %737 = vmatprep.subr.mxu0 0.0
          %738 = vmatpush1.msra.mxu0 0.0
          %739 = vmatprep.subr.mxu0 0.0
          %740 = vmatpush1.msra.mxu0 0.0
          %741 = vmatprep.subr.mxu0 0.0
          %742 = vmatpush1.msra.mxu0 0.0
          %743 = vmatprep.subr.mxu0 0.0
          %744 = vmatpush1.msra.mxu0 0.0
          %745 = vmatprep.subr.mxu0 0.0
          %746 = vmatpush1.msra.mxu0 0.0
          %747 = vmatprep.subr.mxu0 0.0
          %748 = vmatpush1.msra.mxu0 0.0
          %749 = vmatprep.subr.mxu0 0.0
          %750 = vmatpush1.msra.mxu0 0.0
          %751 = vmatprep.subr.mxu0 0.0
          %752 = vmatpush1.msra.mxu0 0.0
          %753 = vmatprep.subr.mxu0 0.0
          %754 = vmatpush1.msra.mxu0 0.0
          %755 = vmatprep.subr.mxu0 0.0
          %756 = vmatpush1.msra.mxu0 0.0
          %757 = vmatprep.subr.mxu0 0.0
          %758 = vmatpush1.msra.mxu0 0.0
          %759 = vmatprep.mubr.f32.mxu0 0.0
          %760 = vmatmul.mubr.f32.gmra.mrb[0].mxu0 %v595
          %v761 = vpop.f32.mrb[0].mxu0
          %v762 = vadd.f32 %v576, %v761
          %v763 = vpop.f32.mrb[0].mxu0
          %v764 = vadd.f32 %v576, %v763
          %765 = vmatprep.mubr.f32.mxu0 0.0
          %766 = vmatmul.mubr.f32.gmra.mrb[0].mxu0 %v598
          %v767 = vpop.f32.mrb[0].mxu0
          %v768 = vadd.f32 %v581, %v767
          %v769 = vpop.f32.mrb[0].mxu0
          %v770 = vadd.f32 %v581, %v769
          %771 = vmatprep.mubr.f32.mxu0 0.0
          %772 = vmatmul.mubr.f32.gmra.mrb[0].mxu0 %v601
          %v773 = vpop.f32.mrb[0].mxu0
          %v774 = vadd.f32 %v586, %v773
          %v775 = vpop.f32.mrb[0].mxu0
          %v776 = vadd.f32 %v586, %v775
          %777 = vmatprep.mubr.f32.mxu0 0.0
          %778 = vmatmul.mubr.f32.gmra.mrb[0].mxu0 %v604
          %v779 = vpop.f32.mrb[0].mxu0
          %v780 = vadd.f32 %v591, %v779
          %v781 = vpop.f32.mrb[0].mxu0
          %v782 = vadd.f32 %v591, %v781
          %783 = vdwg.mxu0
          %v784 = vtanh.pop %v673
          %v785 = vtanh.pop %v675
          %v786 = vtanh.pop %v762
          %v787 = vtanh.pop %v764
          %v788 = vtanh.pop %v679
          %v789 = vtanh.pop %v681
          %v790 = vtanh.pop %v768
          %v791 = vtanh.pop %v770
          %v792 = vtanh.pop %v685
          %v793 = vtanh.pop %v687
          %v794 = vtanh.pop %v774
          %v795 = vtanh.pop %v776
          %v796 = vtanh.pop %v691
          %v797 = vtanh.pop %v693
          %v798 = vtanh.pop %v780
          %v799 = vtanh.pop %v782
          %v800 = vld [vmem:[%s5] sm:$0xff]
          %v801 = vld [vmem:[%s5 + $0x8] sm:$0xff]
          %v802 = vld [vmem:[%s5 + $0x10] sm:$0xff]
          %v803 = vld [vmem:[%s5 + $0x18] sm:$0xff]
          %v804 = vld [vmem:[%s6] sm:$0xff]
          %v805 = vld [vmem:[%s6 + $0x8] sm:$0xff]
          %v806 = vld [vmem:[%s6 + $0x10] sm:$0xff]
          %v807 = vld [vmem:[%s6 + $0x18] sm:$0xff]
          %809 = vset.pattern.permute.xlu0 0
          %810 = vperm.xlu0 %809, %v804
          %v811 = vpop.permute.xlu0 %810
          %814 = vset.pattern.permute.xlu0 0
          %815 = vperm.xlu0 %814, %v805
          %v816 = vpop.permute.xlu0 %815
          %819 = vset.pattern.permute.xlu0 0
          %820 = vperm.xlu0 %819, %v806
          %v821 = vpop.permute.xlu0 %820
          %824 = vset.pattern.permute.xlu0 0
          %825 = vperm.xlu0 %824, %v807
          %v826 = vpop.permute.xlu0 %825
          %v829 = vsel %vm593, %v800, 0
          %v832 = vsel %vm593, %v801, 0
          %v835 = vsel %vm593, %v802, 0
          %v838 = vsel %vm593, %v803, 0
          %840 = vmatprep.subr.mxu0 %v785
          %841 = vmatpush1.msra.mxu0 %v784
          %842 = vmatprep.subr.mxu0 %v789
          %843 = vmatpush1.msra.mxu0 %v788
          %844 = vmatprep.subr.mxu0 %v793
          %845 = vmatpush1.msra.mxu0 %v792
          %846 = vmatprep.subr.mxu0 %v797
          %847 = vmatpush1.msra.mxu0 %v796
          %848 = vmatprep.subr.mxu0 0.0
          %849 = vmatpush1.msra.mxu0 0.0
          %850 = vmatprep.subr.mxu0 0.0
          %851 = vmatpush1.msra.mxu0 0.0
          %852 = vmatprep.subr.mxu0 0.0
          %853 = vmatpush1.msra.mxu0 0.0
          %854 = vmatprep.subr.mxu0 0.0
          %855 = vmatpush1.msra.mxu0 0.0
          %856 = vmatprep.subr.mxu0 0.0
          %857 = vmatpush1.msra.mxu0 0.0
          %858 = vmatprep.subr.mxu0 0.0
          %859 = vmatpush1.msra.mxu0 0.0
          %860 = vmatprep.subr.mxu0 0.0
          %861 = vmatpush1.msra.mxu0 0.0
          %862 = vmatprep.subr.mxu0 0.0
          %863 = vmatpush1.msra.mxu0 0.0
          %864 = vmatprep.subr.mxu0 0.0
          %865 = vmatpush1.msra.mxu0 0.0
          %866 = vmatprep.subr.mxu0 0.0
          %867 = vmatpush1.msra.mxu0 0.0
          %868 = vmatprep.subr.mxu0 0.0
          %869 = vmatpush1.msra.mxu0 0.0
          %870 = vmatprep.subr.mxu0 0.0
          %871 = vmatpush1.msra.mxu0 0.0
          %872 = vmatprep.subr.mxu0 0.0
          %873 = vmatpush1.msra.mxu0 0.0
          %874 = vmatprep.subr.mxu0 0.0
          %875 = vmatpush1.msra.mxu0 0.0
          %876 = vmatprep.subr.mxu0 0.0
          %877 = vmatpush1.msra.mxu0 0.0
          %878 = vmatprep.subr.mxu0 0.0
          %879 = vmatpush1.msra.mxu0 0.0
          %880 = vmatprep.subr.mxu0 0.0
          %881 = vmatpush1.msra.mxu0 0.0
          %882 = vmatprep.subr.mxu0 0.0
          %883 = vmatpush1.msra.mxu0 0.0
          %884 = vmatprep.subr.mxu0 0.0
          %885 = vmatpush1.msra.mxu0 0.0
          %886 = vmatprep.subr.mxu0 0.0
          %887 = vmatpush1.msra.mxu0 0.0
          %888 = vmatprep.subr.mxu0 0.0
          %889 = vmatpush1.msra.mxu0 0.0
          %890 = vmatprep.subr.mxu0 0.0
          %891 = vmatpush1.msra.mxu0 0.0
          %892 = vmatprep.subr.mxu0 0.0
          %893 = vmatpush1.msra.mxu0 0.0
          %894 = vmatprep.subr.mxu0 0.0
          %895 = vmatpush1.msra.mxu0 0.0
          %896 = vmatprep.subr.mxu0 0.0
          %897 = vmatpush1.msra.mxu0 0.0
          %898 = vmatprep.subr.mxu0 0.0
          %899 = vmatpush1.msra.mxu0 0.0
          %900 = vmatprep.subr.mxu0 0.0
          %901 = vmatpush1.msra.mxu0 0.0
          %902 = vmatprep.subr.mxu0 0.0
          %903 = vmatpush1.msra.mxu0 0.0
          %904 = vmatprep.mubr.f32.mxu0 0.0
          %905 = vmatmul.mubr.f32.gmra.mrb[0].mxu0 %v829
          %v906 = vpop.f32.mrb[0].mxu0
          %v907 = vadd.f32 %v811, %v906
          %v908 = vpop.f32.mrb[0].mxu0
          %v909 = vadd.f32 %v811, %v908
          %910 = vmatprep.mubr.f32.mxu0 0.0
          %911 = vmatmul.mubr.f32.gmra.mrb[0].mxu0 %v832
          %v912 = vpop.f32.mrb[0].mxu0
          %v913 = vadd.f32 %v816, %v912
          %v914 = vpop.f32.mrb[0].mxu0
          %v915 = vadd.f32 %v816, %v914
          %916 = vmatprep.mubr.f32.mxu0 0.0
          %917 = vmatmul.mubr.f32.gmra.mrb[0].mxu0 %v835
          %v918 = vpop.f32.mrb[0].mxu0
          %v919 = vadd.f32 %v821, %v918
          %v920 = vpop.f32.mrb[0].mxu0
          %v921 = vadd.f32 %v821, %v920
          %922 = vmatprep.mubr.f32.mxu0 0.0
          %923 = vmatmul.mubr.f32.gmra.mrb[0].mxu0 %v838
          %v924 = vpop.f32.mrb[0].mxu0
          %v925 = vadd.f32 %v826, %v924
          %v926 = vpop.f32.mrb[0].mxu0
          %v927 = vadd.f32 %v826, %v926
          %928 = vdwg.mxu0
          %929 = vmatprep.subr.mxu0 %v787
          %930 = vmatpush1.msra.mxu0 %v786
          %931 = vmatprep.subr.mxu0 %v791
          %932 = vmatpush1.msra.mxu0 %v790
          %933 = vmatprep.subr.mxu0 %v795
          %934 = vmatpush1.msra.mxu0 %v794
          %935 = vmatprep.subr.mxu0 %v799
          %936 = vmatpush1.msra.mxu0 %v798
          %937 = vmatprep.subr.mxu0 0.0
          %938 = vmatpush1.msra.mxu0 0.0
          %939 = vmatprep.subr.mxu0 0.0
          %940 = vmatpush1.msra.mxu0 0.0
          %941 = vmatprep.subr.mxu0 0.0
          %942 = vmatpush1.msra.mxu0 0.0
          %943 = vmatprep.subr.mxu0 0.0
          %944 = vmatpush1.msra.mxu0 0.0
          %945 = vmatprep.subr.mxu0 0.0
          %946 = vmatpush1.msra.mxu0 0.0
          %947 = vmatprep.subr.mxu0 0.0
          %948 = vmatpush1.msra.mxu0 0.0
          %949 = vmatprep.subr.mxu0 0.0
          %950 = vmatpush1.msra.mxu0 0.0
          %951 = vmatprep.subr.mxu0 0.0
          %952 = vmatpush1.msra.mxu0 0.0
          %953 = vmatprep.subr.mxu0 0.0
          %954 = vmatpush1.msra.mxu0 0.0
          %955 = vmatprep.subr.mxu0 0.0
          %956 = vmatpush1.msra.mxu0 0.0
          %957 = vmatprep.subr.mxu0 0.0
          %958 = vmatpush1.msra.mxu0 0.0
          %959 = vmatprep.subr.mxu0 0.0
          %960 = vmatpush1.msra.mxu0 0.0
          %961 = vmatprep.subr.mxu0 0.0
          %962 = vmatpush1.msra.mxu0 0.0
          %963 = vmatprep.subr.mxu0 0.0
          %964 = vmatpush1.msra.mxu0 0.0
          %965 = vmatprep.subr.mxu0 0.0
          %966 = vmatpush1.msra.mxu0 0.0
          %967 = vmatprep.subr.mxu0 0.0
          %968 = vmatpush1.msra.mxu0 0.0
          %969 = vmatprep.subr.mxu0 0.0
          %970 = vmatpush1.msra.mxu0 0.0
          %971 = vmatprep.subr.mxu0 0.0
          %972 = vmatpush1.msra.mxu0 0.0
          %973 = vmatprep.subr.mxu0 0.0
          %974 = vmatpush1.msra.mxu0 0.0
          %975 = vmatprep.subr.mxu0 0.0
          %976 = vmatpush1.msra.mxu0 0.0
          %977 = vmatprep.subr.mxu0 0.0
          %978 = vmatpush1.msra.mxu0 0.0
          %979 = vmatprep.subr.mxu0 0.0
          %980 = vmatpush1.msra.mxu0 0.0
          %981 = vmatprep.subr.mxu0 0.0
          %982 = vmatpush1.msra.mxu0 0.0
          %983 = vmatprep.subr.mxu0 0.0
          %984 = vmatpush1.msra.mxu0 0.0
          %985 = vmatprep.subr.mxu0 0.0
          %986 = vmatpush1.msra.mxu0 0.0
          %987 = vmatprep.subr.mxu0 0.0
          %988 = vmatpush1.msra.mxu0 0.0
          %989 = vmatprep.subr.mxu0 0.0
          %990 = vmatpush1.msra.mxu0 0.0
          %991 = vmatprep.subr.mxu0 0.0
          %992 = vmatpush1.msra.mxu0 0.0
          %993 = vmatprep.mubr.f32.mxu0 0.0
          %994 = vmatmul.mubr.f32.gmra.mrb[0].mxu0 %v829
          %v995 = vpop.f32.mrb[0].mxu0
          %v996 = vadd.f32 %v811, %v995
          %v997 = vpop.f32.mrb[0].mxu0
          %v998 = vadd.f32 %v811, %v997
          %999 = vmatprep.mubr.f32.mxu0 0.0
          %1000 = vmatmul.mubr.f32.gmra.mrb[0].mxu0 %v832
          %v1001 = vpop.f32.mrb[0].mxu0
          %v1002 = vadd.f32 %v816, %v1001
          %v1003 = vpop.f32.mrb[0].mxu0
          %v1004 = vadd.f32 %v816, %v1003
          %1005 = vmatprep.mubr.f32.mxu0 0.0
          %1006 = vmatmul.mubr.f32.gmra.mrb[0].mxu0 %v835
          %v1007 = vpop.f32.mrb[0].mxu0
          %v1008 = vadd.f32 %v821, %v1007
          %v1009 = vpop.f32.mrb[0].mxu0
          %v1010 = vadd.f32 %v821, %v1009
          %1011 = vmatprep.mubr.f32.mxu0 0.0
          %1012 = vmatmul.mubr.f32.gmra.mrb[0].mxu0 %v838
          %v1013 = vpop.f32.mrb[0].mxu0
          %v1014 = vadd.f32 %v826, %v1013
          %v1015 = vpop.f32.mrb[0].mxu0
          %v1016 = vadd.f32 %v826, %v1015
          %1017 = vdwg.mxu0
          %v1018 = vtanh.pop %v907
          %v1019 = vtanh.pop %v909
          %v1020 = vtanh.pop %v996
          %v1021 = vtanh.pop %v998
          %v1022 = vtanh.pop %v913
          %v1023 = vtanh.pop %v915
          %v1024 = vtanh.pop %v1002
          %v1025 = vtanh.pop %v1004
          %v1026 = vtanh.pop %v919
          %v1027 = vtanh.pop %v921
          %v1028 = vtanh.pop %v1008
          %v1029 = vtanh.pop %v1010
          %v1030 = vtanh.pop %v925
          %v1031 = vtanh.pop %v927
          %v1032 = vtanh.pop %v1014
          %v1033 = vtanh.pop %v1016
          %v1034 = vld [vmem:[%s7] sm:$0xff]
          %v1035 = vld [vmem:[%s7 + $0x8] sm:$0xff]
          %v1036 = vld [vmem:[%s7 + $0x10] sm:$0xff]
          %v1037 = vld [vmem:[%s7 + $0x18] sm:$0xff]
          %v1038 = vld [vmem:[#allocation2] sm:$0x1]
          %1040 = vset.pattern.permute.xlu0 0
          %1041 = vperm.xlu0 %1040, %v1034
          %v1042 = vpop.permute.xlu0 %1041
          %1045 = vset.pattern.permute.xlu0 0
          %1046 = vperm.xlu0 %1045, %v1035
          %v1047 = vpop.permute.xlu0 %1046
          %1050 = vset.pattern.permute.xlu0 0
          %1051 = vperm.xlu0 %1050, %v1036
          %v1052 = vpop.permute.xlu0 %1051
          %1055 = vset.pattern.permute.xlu0 0
          %1056 = vperm.xlu0 %1055, %v1037
          %v1057 = vpop.permute.xlu0 %1056
          %v1059 = vmul.f32 %v1042, %v1018
          %v1060 = vmul.f32 %v1042, %v1019
          %v1061 = vmul.f32 %v1042, %v1020
          %v1062 = vmul.f32 %v1042, %v1021
          %v1063 = vmul.f32 %v1047, %v1022
          %v1064 = vmul.f32 %v1047, %v1023
          %v1065 = vmul.f32 %v1047, %v1024
          %v1066 = vmul.f32 %v1047, %v1025
          %v1067 = vmul.f32 %v1052, %v1026
          %v1068 = vmul.f32 %v1052, %v1027
          %v1069 = vmul.f32 %v1052, %v1028
          %v1070 = vmul.f32 %v1052, %v1029
          %v1071 = vmul.f32 %v1057, %v1030
          %v1072 = vmul.f32 %v1057, %v1031
          %v1073 = vmul.f32 %v1057, %v1032
          %v1074 = vmul.f32 %v1057, %v1033
          %v1075 = vadd.f32 %v1059, %v1063
          %v1076 = vadd.f32 %v1075, %v1067
          %v1077 = vadd.f32 %v1076, %v1071
          %v1078 = vrot.slane %v1077, 4
          %v1079 = vadd.f32 %v1077, %v1078
          %v1080 = vrot.slane %v1079, 2
          %v1081 = vadd.f32 %v1079, %v1080
          %v1082 = vrot.slane %v1081, 1
          %v1083 = vadd.f32 %v1081, %v1082
          %v1084 = vadd.f32 %v1060, %v1064
          %v1085 = vadd.f32 %v1084, %v1068
          %v1086 = vadd.f32 %v1085, %v1072
          %v1087 = vrot.slane %v1086, 4
          %v1088 = vadd.f32 %v1086, %v1087
          %v1089 = vrot.slane %v1088, 2
          %v1090 = vadd.f32 %v1088, %v1089
          %v1091 = vrot.slane %v1090, 1
          %v1092 = vadd.f32 %v1090, %v1091
          %v1093 = vadd.f32 %v1061, %v1065
          %v1094 = vadd.f32 %v1093, %v1069
          %v1095 = vadd.f32 %v1094, %v1073
          %v1096 = vrot.slane %v1095, 4
          %v1097 = vadd.f32 %v1095, %v1096
          %v1098 = vrot.slane %v1097, 2
          %v1099 = vadd.f32 %v1097, %v1098
          %v1100 = vrot.slane %v1099, 1
          %v1101 = vadd.f32 %v1099, %v1100
          %v1102 = vadd.f32 %v1062, %v1066
          %v1103 = vadd.f32 %v1102, %v1070
          %v1104 = vadd.f32 %v1103, %v1074
          %v1105 = vrot.slane %v1104, 4
          %v1106 = vadd.f32 %v1104, %v1105
          %v1107 = vrot.slane %v1106, 2
          %v1108 = vadd.f32 %v1106, %v1107
          %v1109 = vrot.slane %v1108, 1
          %v1110 = vadd.f32 %v1108, %v1109
          %1112 = vset.pattern.permute.xlu0 0
          %1113 = vperm.xlu0 %1112, %v1038
          %v1114 = vpop.permute.xlu0 %1113
          %v1116 = vlaneseq
          %v1117 = vshrl.u32 %v1116, 7
          %v1118 = vsub.s32 0, %v1117
          %v1119 = vrot.slane %v1114, %v1118
          %v1120 = vadd.f32 %v1083, %v1119
          %v1121 = vadd.f32 %v1092, %v1119
          %v1122 = vadd.f32 %v1101, %v1119
          %v1123 = vadd.f32 %v1110, %v1119
          %v1124 = vmax.f32 %v1120, 0.0
          %v1125 = vmax.f32 %v1121, 0.0
          %v1126 = vmax.f32 %v1122, 0.0
          %v1127 = vmax.f32 %v1123, 0.0
          %vm1128 = vcmp.ne.f32.partialorder %v1120, %v1120
          %vm1129 = vcmp.ne.f32.partialorder %v1121, %v1121
          %vm1130 = vcmp.ne.f32.partialorder %v1122, %v1122
          %vm1131 = vcmp.ne.f32.partialorder %v1123, %v1123
          %v1132 = vadd.f32 %v1120, 0.0
          %v1133 = vadd.f32 %v1121, 0.0
          %v1134 = vadd.f32 %v1122, 0.0
          %v1135 = vadd.f32 %v1123, 0.0
          %v1136 = vand.u32 2147483647, %v1120
          %v1137 = vand.u32 2147483647, %v1121
          %v1138 = vand.u32 2147483647, %v1122
          %v1139 = vand.u32 2147483647, %v1123
          %v1140 = vsub.f32 0.0, %v1136
          %v1141 = vsub.f32 0.0, %v1137
          %v1142 = vsub.f32 0.0, %v1138
          %v1143 = vsub.f32 0.0, %v1139
          %v1144 = vmul.f32 %v1140, 1.442695
          %v1145 = vpow.pop %v1144
          %v1146 = vmul.f32 %v1141, 1.442695
          %v1147 = vpow.pop %v1146
          %v1148 = vmul.f32 %v1142, 1.442695
          %v1149 = vpow.pop %v1148
          %v1150 = vmul.f32 %v1143, 1.442695
          %v1151 = vpow.pop %v1150
          %v1152 = vadd.f32 %v1145, 1.0
          %v1153 = vlog2.pop %v1152
          %v1154 = vmul.f32 %v1153, 0.6931472
          %v1155 = vmul.f32 -0.5, %v1145
          %v1156 = vadd.f32 %v1155, 1.0
          %v1157 = vmul.f32 %v1156, %v1145
          %v1158 = vand.u32 2147483647, %v1145
          %vm1159 = vcmp.lt.f32.partialorder %v1158, 0.0004427343
          %v1160 = vsel %vm1159, %v1157, %v1154
          %v1161 = vadd.f32 %v1147, 1.0
          %v1162 = vlog2.pop %v1161
          %v1163 = vmul.f32 %v1162, 0.6931472
          %v1164 = vmul.f32 -0.5, %v1147
          %v1165 = vadd.f32 %v1164, 1.0
          %v1166 = vmul.f32 %v1165, %v1147
          %v1167 = vand.u32 2147483647, %v1147
          %vm1168 = vcmp.lt.f32.partialorder %v1167, 0.0004427343
          %v1169 = vsel %vm1168, %v1166, %v1163
          %v1170 = vadd.f32 %v1149, 1.0
          %v1171 = vlog2.pop %v1170
          %v1172 = vmul.f32 %v1171, 0.6931472
          %v1173 = vmul.f32 -0.5, %v1149
          %v1174 = vadd.f32 %v1173, 1.0
          %v1175 = vmul.f32 %v1174, %v1149
          %v1176 = vand.u32 2147483647, %v1149
          %vm1177 = vcmp.lt.f32.partialorder %v1176, 0.0004427343
          %v1178 = vsel %vm1177, %v1175, %v1172
          %v1179 = vadd.f32 %v1151, 1.0
          %v1180 = vlog2.pop %v1179
          %v1181 = vmul.f32 %v1180, 0.6931472
          %v1182 = vmul.f32 -0.5, %v1151
          %v1183 = vadd.f32 %v1182, 1.0
          %v1184 = vmul.f32 %v1183, %v1151
          %v1185 = vand.u32 2147483647, %v1151
          %vm1186 = vcmp.lt.f32.partialorder %v1185, 0.0004427343
          %v1187 = vsel %vm1186, %v1184, %v1181
          %v1188 = vadd.f32 %v1124, %v1160
          %v1189 = vadd.f32 %v1125, %v1169
          %v1190 = vadd.f32 %v1126, %v1178
          %v1191 = vadd.f32 %v1127, %v1187
          %v1192 = vsel %vm1128, %v1132, %v1188
          %v1193 = vsel %vm1129, %v1133, %v1189
          %v1194 = vsel %vm1130, %v1134, %v1190
          %v1195 = vsel %vm1131, %v1135, %v1191
          %v1200 = vcombine.low %v1192, %v1193
          %v1201 = vcombine.low %v1194, %v1195
          %v1203 = vunpack.c.l.s4 1966171168
          %v1204 = vunpack.c.0.s8 %v1203
          %v1205 = vlaneseq
          %v1206 = vshrl.u32 %v1205, 7
          %v1207 = vsub.s32 %v1204, %v1206
          %v1208 = vrot.slane %v1200, %v1207
          %v1210 = vunpack.c.l.s4 1966171168
          %v1211 = vunpack.c.0.s8 %v1210
          %v1212 = vlaneseq
          %v1213 = vshrl.u32 %v1212, 7
          %v1214 = vsub.s32 %v1211, %v1213
          %v1215 = vrot.slane %v1201, %v1214
          %v1216 = vcombine.low %v1208, %v1215
          %v1218 = vunpack.c.l.s4 1966171168
          %v1219 = vunpack.c.0.s8 %v1218
          %v1220 = vlaneseq
          %v1221 = vshrl.u32 %v1220, 7
          %v1222 = vsub.s32 %v1219, %v1221
          %v1223 = vrot.slane %v1216, %v1222
          %s1225 = scalar_lea.vmem %s328, %s343 [#allocation3]
          %v1226 = vlaneseq
          %vm1227 = vcmp.ge.s32.totalorder %v1226, 0
          %vm1228 = vcmp.lt.s32.totalorder %v1226, 512
          %vm1229 = vmand %vm1227, %vm1228
          %1230 = vst.msk [vmem:[%s1225] sm:$0xf] %vm1229, %v1223
        $region61: #{tpu_custom_call.1} parent=55 // loop_footer
          %s341 = sadd.s32 1, %s337
        $region62: #{tpu_custom_call.1} parent=55 // loop_footer_branch
          %336 = sbr.rel target = $region58
        $region63: #{tpu_custom_call.1} parent=55 // loop_exit
          _
        %s1231 = sand.u32 %s227, 1
        %s1232 = scalar_lea.sflag [#allocation4], %s1231
        %s1233 = sand.u32 %s227, 1
        %s1234 = smul.addr %s1233, 8
        %s1235 = scalar_lea.vmem [#allocation3], %s1234
        // Predicated region
        $region64: #{tpu_custom_call.1} parent=55 // pred_check
          %p1236 = pneg %p237
        $region65: #{tpu_custom_call.1} parent=55 // pred_check_branch
          %1238 = sbr.rel (%p1236) target = $region67
        $region66: #{tpu_custom_call.1} parent=55 // pred_region
          %s1239 = smul.u32 8, %s25
          %s1241 = ssub.s32 128, 128
          %1242 = vsyncadd %s1232, %s1241
          %s1243 = smul.addr %s1239, 16
          %s1244 = scalar_lea.hbm %s9, %s1243
          %s1246 = sshll.u32 %s1235, 4
          %s1247 = int_to_ptr.vmem [resolvable:$true] %s1246
          %1249 = dma.vmem_to_hbm [thread:$0]  %s1247, 128, %s1244, %s1232
        $region67: #{tpu_custom_call.1} parent=55 // pred_fallthru
          _
      $region56: #{tpu_custom_call.1} parent=5 // pred_fallthru
        _
      %p1250 = scmp.le.s32.totalorder 2, %s20
      // Predicated region
      $region68: #{tpu_custom_call.1} parent=5 // pred_check
        %p1251 = pneg %p1250
      $region69: #{tpu_custom_call.1} parent=5 // pred_check_branch
        %1253 = sbr.rel (%p1251) target = $region71
      $region70: #{tpu_custom_call.1} parent=5 // pred_region
        %s1254 = ssub.s32 %s20, 2
        // Predicated region
        $region72: #{tpu_custom_call.1} parent=70 // pred_check
          %p1255 = pneg %p243
        $region73: #{tpu_custom_call.1} parent=70 // pred_check_branch
          %1257 = sbr.rel (%p1255) target = $region75
        $region74: #{tpu_custom_call.1} parent=70 // pred_region
          %s1258 = sand.u32 %s228, 1
          %s1259 = scalar_lea.sflag [#allocation4], %s1258
          %s1260 = sand.u32 %s228, 1
          %s1261 = smul.addr %s1260, 8
          %s1262 = scalar_lea.vmem [#allocation3], %s1261
          %1263 = dma.done %s1259, 128
        $region75: #{tpu_custom_call.1} parent=70 // pred_fallthru
          _
      $region71: #{tpu_custom_call.1} parent=5 // pred_fallthru
        _
    $region6: #{tpu_custom_call.1} parent=1 // loop_footer
      %s24 = sadd.s32 1, %s20
    $region7: #{tpu_custom_call.1} parent=1 // loop_footer_branch
      %19 = sbr.rel target = $region3
    $region8: #{tpu_custom_call.1} parent=1 // loop_exit
      _
    %1264 = vsyncpa [#allocation4], 1
    %s1265 = scalar_lea.sflag [#allocation4], 1
    %1266 = vsyncpa %s1265, 1

</llo_original>
